<compile_context>
chip_gen: v5e
topology: v5e:2x2
jax: 0.10.0
libtpu: 0.0.40
codegen_flags: <defaults>
</compile_context>

<pallas_src>
import functools

import jax
import jax.numpy as jnp
from jax.experimental import pallas as pl
from jax.experimental.pallas import tpu as pltpu


def _round_up(x: int, m: int) -> int:
    return ((x + m - 1) // m) * m


def _sc_attention_kernel(p_ref, qt_ref, q_ref, m_ref, wt_ref, b_ref, o_ref,
                         *, n_sub, sub_rows):
    # p_ref : (1, TP, Hp)  passage tile                (activation dtype)
    # qt_ref: (1, Hp, Qp)  question^T (host-transposed; no per-step XLU work)
    # q_ref : (1, Qp, Hp)  question                    (activation dtype)
    # m_ref : (1, 1,  Qp)  float32 mask (pad lanes already zero)
    # wt_ref: (Hp, Hp)     map_linear weight^T, activation dtype, VMEM-resident
    # b_ref : (1, Hp)      map_linear bias, float32,   VMEM-resident
    # o_ref : (1, TP, Hp)
    qt = qt_ref[0]                     # (Hp, Qp)
    q = q_ref[0]                       # (Qp, Hp)
    mask = m_ref[0]                    # (1, Qp) f32
    w = wt_ref[...]                    # (Hp, Hp)
    bias = b_ref[...]                  # (1, Hp) f32

    # Sub-tile the passage rows so sub-tile i+1's scores matmul (MXU) can
    # overlap sub-tile i's exp/softmax (EUP/VPU) in the LLO schedule.
    for s in range(n_sub):
        rows = pl.ds(s * sub_rows, sub_rows)
        p = p_ref[0, rows, :]                                          # (TS, Hp)

        # scores = p @ q^T : lhs-minor x rhs-major contraction, f32 accumulate.
        scores = jnp.dot(p, qt, preferred_element_type=jnp.float32)    # (TS, Qp)

        # Fused masked_softmax (memory_efficient=False semantics):
        #   softmax(scores * mask) * mask, renormalized with eps 1e-13.
        masked = scores * mask
        mx = jnp.max(masked, axis=-1, keepdims=True)
        em = jnp.exp(masked - mx) * mask
        denom = jnp.sum(em, axis=-1, keepdims=True) + 1e-13
        # Cast to activation dtype right away: halves the live (TS,Qp) buffer
        # and feeds the MXU directly.
        alpha = (em * pl.reciprocal(denom, approx=True)).astype(q.dtype)

        # context = alpha @ question  (activation-dtype MXU, f32 accumulate).
        ctx = jnp.dot(alpha, q, preferred_element_type=jnp.float32)     # (TS, Hp)

        # map_linear (weight pre-cast to activation dtype, pre-transposed to
        # [in,out]) + bias (f32) + ReLU; lane-dense aligned store.
        out = jnp.dot(ctx.astype(w.dtype), w,
                      preferred_element_type=jnp.float32) + bias
        o_ref[0, rows, :] = jnp.maximum(out, 0.0).astype(o_ref.dtype)


def sc_attention(passage, question, q_mask, w_map, b_map, *, block_p=None):
    """passage (B,P,H), question (B,Q,H), q_mask (B,Q), w_map (H,H) in torch
    [out,in] layout, b_map (H,).  Returns (B,P,H) in passage.dtype."""
    B, P, H = passage.shape
    Bq, Q, Hq = question.shape
    assert (Bq, Hq) == (B, H)
    dtype = passage.dtype
    itemsize = jnp.dtype(dtype).itemsize
    sub = {4: 8, 2: 16, 1: 32}.get(itemsize, 8)    # sublane multiple per dtype

    Hp = _round_up(H, 128)
    Qp = _round_up(Q, 128)

    # ---- per-generation tiling / VMEM defaults -----------------------------
    try:
        kind = jax.devices()[0].device_kind.lower()
    except Exception:
        kind = ""
    is_v7 = ("v7" in kind) or ("7x" in kind)
    # v7x has 64 MiB physical VMEM; v4/v5e/v6e have 128 MiB.
    vmem_budget = (56 << 20) if is_v7 else (100 << 20)

    if block_p is None:
        target = 256 if is_v7 else 512     # big tiles amortize step overhead
        block_p = min(target, _round_up(P, sub))
    block_p = max(sub, _round_up(block_p, sub))

    # Keep >= 2 grid steps so both TensorCores get work on multi-core parts.
    while B * pl.cdiv(P, block_p) < 2 and block_p > sub:
        block_p = max(sub, _round_up(block_p // 2, sub))

    def vmem_estimate(bp):
        return (2 * bp * Hp * itemsize          # passage tile (double-buffered)
                + 2 * bp * Hp * itemsize        # output tile  (double-buffered)
                + 4 * Qp * Hp * itemsize        # question + question^T (2 bufs each)
                + Hp * Hp * itemsize + 4 * Hp   # weight + bias (single resident copy)
                + 2 * Qp * 4                    # mask
                + 4 * bp * Qp * 4)              # f32 softmax temporaries

    while vmem_estimate(block_p) > vmem_budget and block_p > sub:
        block_p = max(sub, _round_up(block_p // 2, sub))

    Pp = _round_up(P, block_p)
    vmem_limit = int(min(vmem_budget, max(32 << 20, 2 * vmem_estimate(block_p))))

    # Sub-tiling factor for MXU/EUP overlap inside a step (keep sublane-aligned).
    n_sub = 2 if (block_p >= 2 * sub and block_p % (2 * sub) == 0) else 1
    sub_rows = block_p // n_sub

    # ---- host-side one-time layout work (skipped when already aligned) -----
    if P == Pp and H == Hp:
        p_pad = passage
    else:
        p_pad = jnp.zeros((B, Pp, Hp), dtype).at[:, :P, :H].set(passage)

    q_in = question if question.dtype == dtype else question.astype(dtype)
    if Q == Qp and H == Hp:
        q_pad = q_in
    else:
        q_pad = jnp.zeros((B, Qp, Hp), dtype).at[:, :Q, :H].set(q_in)
    qt_pad = jnp.swapaxes(q_pad, 1, 2)             # (B, Hp, Qp), one-time transpose

    mask_f = q_mask.astype(jnp.float32)
    if Q == Qp:
        m_pad = mask_f.reshape(B, 1, Qp)
    else:
        m_pad = jnp.zeros((B, 1, Qp), jnp.float32).at[:, 0, :Q].set(mask_f)

    wt = w_map.astype(dtype).T                     # [in, out], activation dtype
    if H == Hp:
        wt_pad = wt
    else:
        wt_pad = jnp.zeros((Hp, Hp), dtype).at[:H, :H].set(wt)
    bias_f = b_map.astype(jnp.float32)
    if H == Hp:
        b_pad = bias_f.reshape(1, Hp)
    else:
        b_pad = jnp.zeros((1, Hp), jnp.float32).at[0, :H].set(bias_f)

    kernel = functools.partial(_sc_attention_kernel, n_sub=n_sub, sub_rows=sub_rows)

    out_pad = pl.pallas_call(
        kernel,
        out_shape=jax.ShapeDtypeStruct((B, Pp, Hp), dtype),
        grid_spec=pltpu.PrefetchScalarGridSpec(
            num_scalar_prefetch=0,
            grid=(B, Pp // block_p),
            in_specs=[
                pl.BlockSpec((1, block_p, Hp), lambda b, i: (b, i, 0)),  # passage tile
                pl.BlockSpec((1, Hp, Qp), lambda b, i: (b, 0, 0)),       # question^T
                pl.BlockSpec((1, Qp, Hp), lambda b, i: (b, 0, 0)),       # question
                pl.BlockSpec((1, 1, Qp), lambda b, i: (b, 0, 0)),        # mask
                # Grid-invariant operands: single VMEM-resident copy (no
                # pointless double-buffering of the (Hp,Hp) weight / bias).
                pl.BlockSpec(memory_space=pltpu.MemorySpace.VMEM),       # W_map^T
                pl.BlockSpec(memory_space=pltpu.MemorySpace.VMEM),       # bias
            ],
            out_specs=pl.BlockSpec((1, block_p, Hp), lambda b, i: (b, i, 0)),
        ),
        compiler_params=pltpu.CompilerParams(
            dimension_semantics=("parallel", "parallel"),
            vmem_limit_bytes=vmem_limit),
    )(p_pad, qt_pad, q_pad, m_pad, wt_pad, b_pad)

    if P == Pp and H == Hp:
        return out_pad
    return out_pad[:, :P, :H]


def _reference(passage, question, q_mask, w_map, b_map):
    p = passage.astype(jnp.float32)
    q = question.astype(jnp.float32)
    scores = jnp.einsum("bpd,bqd->bpq", p, q)
    mask = q_mask.astype(jnp.float32)[:, None, :]
    masked = scores * mask
    sm = jax.nn.softmax(masked, axis=-1)
    r = sm * mask
    alpha = r / (jnp.sum(r, axis=-1, keepdims=True) + 1e-13)
    out = jnp.einsum("bpq,bqd->bpd", alpha, q)
    out = jnp.einsum("bpd,hd->bph", out, w_map.astype(jnp.float32))
    out = out + b_map.astype(jnp.float32)[None, None, :]
    return jax.nn.relu(out)


if __name__ == "__main__":
    key = jax.random.PRNGKey(0)
    k1, k2, k3, k4, k5, k6, k7, k8 = jax.random.split(key, 8)

    # ---- check 1: float32, small shapes (pads H,Q -> 128 internally) -------
    B, P, Q, H = 2, 8, 8, 32
    passage = jax.random.normal(k1, (B, P, H), dtype=jnp.float32)
    question = jax.random.normal(k2, (B, Q, H), dtype=jnp.float32)
    q_mask = jnp.ones((B, Q), dtype=jnp.float32).at[1, Q - 2:].set(0.0)
    bound = 1.0 / (H ** 0.5)
    w_map = jax.random.uniform(k3, (H, H), minval=-bound, maxval=bound,
                               dtype=jnp.float32)
    b_map = jax.random.uniform(k4, (H,), minval=-bound, maxval=bound,
                               dtype=jnp.float32)

    out = jax.block_until_ready(sc_attention(passage, question, q_mask,
                                             w_map, b_map))
    ref = _reference(passage, question, q_mask, w_map, b_map)
    assert out.shape == (B, P, H)
    assert jnp.allclose(out, ref, atol=5e-3, rtol=5e-3), "f32 mismatch vs reference"

    # ---- check 2: bfloat16, uneven shapes (padding + P sub-tiling path) ----
    B2, P2, Q2, H2 = 2, 24, 10, 40
    p2 = (0.5 * jax.random.normal(k5, (B2, P2, H2))).astype(jnp.bfloat16)
    q2 = (0.5 * jax.random.normal(k6, (B2, Q2, H2))).astype(jnp.bfloat16)
    m2 = jnp.ones((B2, Q2), dtype=jnp.float32).at[0, Q2 - 3:].set(0.0)
    bound2 = 1.0 / (H2 ** 0.5)
    w2 = jax.random.uniform(k7, (H2, H2), minval=-bound2, maxval=bound2,
                            dtype=jnp.float32)          # f32 weight on purpose:
    b2 = jax.random.uniform(k8, (H2,), minval=-bound2, maxval=bound2,
                            dtype=jnp.float32)          # wrapper casts to bf16
    out2 = jax.block_until_ready(sc_attention(p2, q2, m2, w2, b2))
    ref2 = _reference(p2, q2, m2, w2, b2)
    assert out2.shape == (B2, P2, H2)
    assert jnp.allclose(out2.astype(jnp.float32), ref2, atol=5e-2, rtol=5e-2), \
        "bf16 mismatch vs reference"

    print("KERNEL_OK")
</pallas_src>

<mosaic_0001>
module attributes {stable_mosaic.version = 11 : i64} {
  func.func @_sc_attention_kernel(%arg0: i32, %arg1: i32, %arg2: memref<1x8x128xf32, #tpu.memory_space<vmem>>, %arg3: memref<1x128x128xf32, #tpu.memory_space<vmem>>, %arg4: memref<1x128x128xf32, #tpu.memory_space<vmem>>, %arg5: memref<1x1x128xf32, #tpu.memory_space<vmem>>, %arg6: memref<128x128xf32, #tpu.memory_space<vmem>>, %arg7: memref<1x128xf32, #tpu.memory_space<vmem>>, %arg8: memref<1x8x128xf32, #tpu.memory_space<vmem>>) attributes {dimension_semantics = [#tpu.dimension_semantics<parallel>, #tpu.dimension_semantics<parallel>], iteration_bounds = array<i64: 2, 1>, scalar_prefetch = 0 : i64, scratch_operands = 0 : i64, tpu.core_type = #tpu.core_type<tc>, window_params = [{transform_indices = @transform_0, window_bounds = array<i64: 1, 8, 128>}, {transform_indices = @transform_1, window_bounds = array<i64: 1, 128, 128>}, {transform_indices = @transform_2, window_bounds = array<i64: 1, 128, 128>}, {transform_indices = @transform_3, window_bounds = array<i64: 1, 1, 128>}, {pipeline_mode = #tpu.pipeline_mode<synchronous>, transform_indices = @transform_4, window_bounds = array<i64: 128, 128>}, {pipeline_mode = #tpu.pipeline_mode<synchronous>, transform_indices = @transform_5, window_bounds = array<i64: 1, 128>}, {transform_indices = @transform_6, window_bounds = array<i64: 1, 8, 128>}]} {
    %c0 = arith.constant 0 : index
    %c0_0 = arith.constant 0 : index
    %c0_1 = arith.constant 0 : index
    %0 = vector.load %arg3[%c0, %c0_0, %c0_1] : memref<1x128x128xf32, #tpu.memory_space<vmem>>, vector<1x128x128xf32>
    %1 = vector.shape_cast %0 : vector<1x128x128xf32> to vector<128x128xf32>
    %c0_2 = arith.constant 0 : index
    %c0_3 = arith.constant 0 : index
    %c0_4 = arith.constant 0 : index
    %2 = vector.load %arg4[%c0_2, %c0_3, %c0_4] : memref<1x128x128xf32, #tpu.memory_space<vmem>>, vector<1x128x128xf32>
    %3 = vector.shape_cast %2 : vector<1x128x128xf32> to vector<128x128xf32>
    %c0_5 = arith.constant 0 : index
    %c0_6 = arith.constant 0 : index
    %c0_7 = arith.constant 0 : index
    %4 = vector.load %arg5[%c0_5, %c0_6, %c0_7] : memref<1x1x128xf32, #tpu.memory_space<vmem>>, vector<1x1x128xf32>
    %5 = vector.shape_cast %4 : vector<1x1x128xf32> to vector<1x128xf32>
    %c0_8 = arith.constant 0 : index
    %c0_9 = arith.constant 0 : index
    %6 = vector.load %arg6[%c0_8, %c0_9] : memref<128x128xf32, #tpu.memory_space<vmem>>, vector<128x128xf32>
    %c0_10 = arith.constant 0 : index
    %c0_11 = arith.constant 0 : index
    %7 = vector.load %arg7[%c0_10, %c0_11] : memref<1x128xf32, #tpu.memory_space<vmem>>, vector<1x128xf32>
    %c0_12 = arith.constant 0 : index
    %c0_13 = arith.constant 0 : index
    %c0_14 = arith.constant 0 : index
    %8 = vector.load %arg2[%c0_12, %c0_13, %c0_14] : memref<1x8x128xf32, #tpu.memory_space<vmem>>, vector<1x8x128xf32>
    %9 = vector.shape_cast %8 : vector<1x8x128xf32> to vector<8x128xf32>
    %cst = arith.constant dense<0.000000e+00> : vector<8x128xf32>
    %10 = tpu.matmul %9, %1, %cst {dimension_numbers = #tpu.dot_dimension_numbers<[1], [0], [0], [1], [0, 0, 1, 1], [], []>} : vector<8x128xf32>, vector<128x128xf32>, vector<8x128xf32> -> vector<8x128xf32>
    %11 = vector.broadcast %5 : vector<1x128xf32> to vector<8x128xf32>
    %12 = arith.mulf %10, %11 : vector<8x128xf32>
    %cst_15 = arith.constant dense<0xFF800000> : vector<8xf32>
    %13 = vector.multi_reduction <maximumf>, %12, %cst_15 [1] : vector<8x128xf32> to vector<8xf32>
    %14 = vector.shape_cast %13 : vector<8xf32> to vector<8x1xf32>
    %15 = vector.broadcast %14 : vector<8x1xf32> to vector<8x128xf32>
    %16 = arith.subf %12, %15 : vector<8x128xf32>
    %17 = math.exp %16 : vector<8x128xf32>
    %18 = vector.broadcast %5 : vector<1x128xf32> to vector<8x128xf32>
    %19 = arith.mulf %17, %18 : vector<8x128xf32>
    %cst_16 = arith.constant dense<0.000000e+00> : vector<8xf32>
    %20 = vector.multi_reduction <add>, %19, %cst_16 [1] : vector<8x128xf32> to vector<8xf32>
    %21 = vector.shape_cast %20 : vector<8xf32> to vector<8x1xf32>
    %cst_17 = arith.constant 9.99999982E-14 : f32
    %22 = vector.broadcast %cst_17 : f32 to vector<8x1xf32>
    %23 = arith.addf %21, %22 : vector<8x1xf32>
    %24 = tpu.reciprocal %23 {approx = true} : vector<8x1xf32> -> vector<8x1xf32>
    %25 = vector.broadcast %24 : vector<8x1xf32> to vector<8x128xf32>
    %26 = arith.mulf %19, %25 : vector<8x128xf32>
    %cst_18 = arith.constant dense<0.000000e+00> : vector<8x128xf32>
    %27 = tpu.matmul %26, %3, %cst_18 {dimension_numbers = #tpu.dot_dimension_numbers<[1], [0], [0], [1], [0, 0, 1, 1], [], []>} : vector<8x128xf32>, vector<128x128xf32>, vector<8x128xf32> -> vector<8x128xf32>
    %cst_19 = arith.constant dense<0.000000e+00> : vector<8x128xf32>
    %28 = tpu.matmul %27, %6, %cst_19 {dimension_numbers = #tpu.dot_dimension_numbers<[1], [0], [0], [1], [0, 0, 1, 1], [], []>} : vector<8x128xf32>, vector<128x128xf32>, vector<8x128xf32> -> vector<8x128xf32>
    %29 = vector.broadcast %7 : vector<1x128xf32> to vector<8x128xf32>
    %30 = arith.addf %28, %29 : vector<8x128xf32>
    %cst_20 = arith.constant 0.000000e+00 : f32
    %31 = vector.broadcast %cst_20 : f32 to vector<8x128xf32>
    %32 = arith.maximumf %30, %31 : vector<8x128xf32>
    %c0_21 = arith.constant 0 : index
    %c0_22 = arith.constant 0 : index
    %c0_23 = arith.constant 0 : index
    %33 = vector.load %arg8[%c0_21, %c0_22, %c0_23] : memref<1x8x128xf32, #tpu.memory_space<vmem>>, vector<1x8x128xf32>
    %34 = vector.shape_cast %33 : vector<1x8x128xf32> to vector<8x128xf32>
    %35 = vector.shape_cast %32 : vector<8x128xf32> to vector<1x8x128xf32>
    tpu.vector_store %arg8[%c0_21, %c0_22, %c0_23], %35 {strides = array<i32>} : memref<1x8x128xf32, #tpu.memory_space<vmem>>, vector<1x8x128xf32>,
    return
  }
  func.func @transform_0(%arg0: i32, %arg1: i32) -> (i32, i32, i32) {
    %c0_i32 = arith.constant 0 : i32
    %c0_i32_0 = arith.constant 0 : i32
    return %arg0, %arg1, %c0_i32 : i32, i32, i32
  }
  func.func @transform_1(%arg0: i32, %arg1: i32) -> (i32, i32, i32) {
    %c0_i32 = arith.constant 0 : i32
    %c0_i32_0 = arith.constant 0 : i32
    %c0_i32_1 = arith.constant 0 : i32
    return %arg0, %c0_i32, %c0_i32_0 : i32, i32, i32
  }
  func.func @transform_2(%arg0: i32, %arg1: i32) -> (i32, i32, i32) {
    %c0_i32 = arith.constant 0 : i32
    %c0_i32_0 = arith.constant 0 : i32
    %c0_i32_1 = arith.constant 0 : i32
    return %arg0, %c0_i32, %c0_i32_0 : i32, i32, i32
  }
  func.func @transform_3(%arg0: i32, %arg1: i32) -> (i32, i32, i32) {
    %c0_i32 = arith.constant 0 : i32
    %c0_i32_0 = arith.constant 0 : i32
    %c0_i32_1 = arith.constant 0 : i32
    return %arg0, %c0_i32, %c0_i32_0 : i32, i32, i32
  }
  func.func @transform_4(%arg0: i32, %arg1: i32) -> (i32, i32) {
    %c0_i32 = arith.constant 0 : i32
    %c0_i32_0 = arith.constant 0 : i32
    %c0_i32_1 = arith.constant 0 : i32
    return %c0_i32, %c0_i32_0 : i32, i32
  }
  func.func @transform_5(%arg0: i32, %arg1: i32) -> (i32, i32) {
    %c0_i32 = arith.constant 0 : i32
    %c0_i32_0 = arith.constant 0 : i32
    %c0_i32_1 = arith.constant 0 : i32
    return %c0_i32, %c0_i32_0 : i32, i32
  }
  func.func @transform_6(%arg0: i32, %arg1: i32) -> (i32, i32, i32) {
    %c0_i32 = arith.constant 0 : i32
    %c0_i32_0 = arith.constant 0 : i32
    return %arg0, %arg1, %c0_i32 : i32, i32, i32
  }
}

</mosaic_0001>

<llo_original>
// kernel: tpu_custom_call.1
$region0: #{tpu_custom_call.1}
  #allocation0 [shape = 'u32[]', space=smem, size = 0x4, offset = 0x4, fixed_abs, tag = 'smem constant byte address 0x4 - core index']
  #allocation1 [shape = 'u32[72,128]{1,0:T(1,128)}', space=vmem, size = 0x9000, scoped, tag = 'internal scratch']
  %s0 = inlined_call_operand.hbm [shape: f32[2,8,128], index: 0, kind: input, shape index: {}]
  %s1 = inlined_call_operand.hbm [shape: f32[2,128,128], index: 1, kind: input, shape index: {}]
  %s2 = inlined_call_operand.hbm [shape: f32[2,128,128], index: 2, kind: input, shape index: {}]
  %s3 = inlined_call_operand.vmem [shape: f32[2,1,128], index: 3, kind: input, shape index: {}]
  %s4 = inlined_call_operand.hbm [shape: f32[128,128], index: 4, kind: input, shape index: {}]
  %s5 = inlined_call_operand.vmem [shape: f32[1,128], index: 5, kind: input, shape index: {}]
  %s6 = inlined_call_operand.hbm [shape: f32[2,8,128], index: 6, kind: output, shape index: {}]
  %s7 = sld [smem:[#allocation0]]
  $region73: #{tpu_custom_call.1} parent=0
    _
  %s9 = ssub.s32 1, %s7
  %s10 = scalar_select 0, %s9, %s7
  $region1: #{tpu_custom_call.1} parent=0
    #allocation2 [shape = 'u8[8192]{0}', space=vmem, size = 0x2000, scoped, tag = 'input window, operand 0']
    #allocation3 [shape = 's32[2]{0}', space=sflag, size = 0x8, scoped, tag = 'scoped memory for tpu_custom_call.1']
    #allocation4 [shape = 's32[2]{0}', space=sflag, size = 0x8, scoped, tag = 'scoped memory for tpu_custom_call.1']
    #allocation5 [shape = 'u8[131072]{0}', space=vmem, size = 0x20000, scoped, tag = 'input window, operand 1']
    #allocation6 [shape = 's32[2]{0}', space=sflag, size = 0x8, scoped, tag = 'scoped memory for tpu_custom_call.1']
    #allocation7 [shape = 'u8[131072]{0}', space=vmem, size = 0x20000, scoped, tag = 'input window, operand 2']
    #allocation8 [shape = 'u8[65536]{0}', space=vmem, size = 0x10000, scoped, tag = 'input window, operand 4, single buffered']
    #allocation9 [shape = 's32[1]{0}', space=sflag, size = 0x4, scoped, tag = 'scoped memory for tpu_custom_call.1']
    #allocation10 [shape = 'u8[8192]{0}', space=vmem, size = 0x2000, scoped, tag = 'output window, operand 0']
    %11 = vsyncpa [#allocation3], 0
    %s12 = scalar_lea.sflag [#allocation3], 1
    %13 = vsyncpa %s12, 0
    %14 = vsyncpa [#allocation6], 0
    %s15 = scalar_lea.sflag [#allocation6], 1
    %16 = vsyncpa %s15, 0
    %17 = vsyncpa [#allocation9], 0
    %18 = vsyncpa [#allocation4], 0
    %s19 = scalar_lea.sflag [#allocation4], 1
    %20 = vsyncpa %s19, 0
    loop: start=0, step=1, limit=4
    $region2: #{tpu_custom_call.1} parent=1 // loop_pre_header
      _
    $region3: #{tpu_custom_call.1} parent=1 // loop_header
      %s22 = sphi 0, %s26
      %p23 = scmp.ge.s32.totalorder %s22, 4
      %s29 = sphi 0, %s41
      %s30 = sphi 0, %s37
      %s31 = sphi 0, %s29
      %s32 = sphi 0, %s30
      %s33 = sphi 0, %s31
      %s34 = sphi 0, %s32
      %s46 = sphi 0, %s48
      %s49 = sphi 0, %s46
      %s50 = sphi 0, %s49
      %s66 = sphi 0, %s50
      %s72 = sphi 0, %s74
      %s75 = sphi 0, %s72
      %s76 = sphi 0, %s75
      %s92 = sphi 0, %s76
      %s98 = sphi 0, %s100
      %s101 = sphi 0, %s98
      %s102 = sphi 0, %s101
      %s118 = sphi 0, %s102
      %s124 = sphi 0, %s126
      %s127 = sphi 0, %s124
      %s128 = sphi 0, %s127
      %s144 = sphi 0, %s128
      %s148 = sphi 0, %s148
      %s150 = sphi 0, %s148
      %s151 = sphi 0, %s150
      %s165 = sphi 0, %s151
      %s169 = sphi 0, %s169
      %s171 = sphi 0, %s169
      %s172 = sphi 0, %s171
      %s186 = sphi 0, %s172
      %s194 = sphi 0, %s196
      %s197 = sphi 0, %s194
      %s198 = sphi 0, %s197
      %s214 = sphi 0, %s198
    $region4: #{tpu_custom_call.1} parent=1 // loop_header_branch
      %25 = sbr.rel (%p23) target = $region8
    $region5: #{tpu_custom_call.1} parent=1 // loop_body
      %s27 = ssub.s32 %s22, 1
      %s28 = ssub.s32 %s22, 2
      %s35 = sadd.s32 1, %s30
      %p36 = scmp.ge.s32.totalorder %s35, 1
      %s37 = scalar_select %p36, 0, %s35
      %s38 = sadd.s32 1, %s29
      %s39 = scalar_select %p36, %s38, %s29
      %p40 = scmp.ge.s32.totalorder %s39, 2
      %s41 = scalar_select %p40, 0, %s39
      %s42 = ssub.s32 %s29, %s41
      %s43 = ssub.s32 %s30, %s37
      %s44 = sor.u32 %s42, %s43
      %p45 = scmp.eq.s32.totalorder %s44, 0
      %s47 = sadd.s32 %s46, 1
      %s48 = scalar_select %p45, %s46, %s47
      %p51 = pneg %p45
      %p52 = scmp.eq.s32.totalorder %s22, 1
      %p53 = por %p51, %p52
      %p54 = scmp.ne.s32.totalorder %s46, %s49
      %p55 = scmp.eq.s32.totalorder %s22, 0
      %p56 = por %p54, %p55
      %p57 = scmp.ne.s32.totalorder %s46, %s49
      %p58 = scmp.eq.s32.totalorder %s27, 1
      %p59 = por %p57, %p58
      %p60 = scmp.ne.s32.totalorder %s49, %s50
      %p61 = scmp.eq.s32.totalorder %s27, 0
      %p62 = por %p60, %p61
      %p63 = scmp.ne.s32.totalorder %s49, %s50
      %p64 = scmp.eq.s32.totalorder %s28, 1
      %p65 = por %p63, %p64
      %p67 = scmp.ne.s32.totalorder %s50, %s66
      %p68 = scmp.eq.s32.totalorder %s28, 0
      %p69 = por %p67, %p68
      %s70 = ssub.s32 %s29, %s41
      %p71 = scmp.eq.s32.totalorder %s70, 0
      %s73 = sadd.s32 %s72, 1
      %s74 = scalar_select %p71, %s72, %s73
      %p77 = pneg %p71
      %p78 = scmp.eq.s32.totalorder %s22, 1
      %p79 = por %p77, %p78
      %p80 = scmp.ne.s32.totalorder %s72, %s75
      %p81 = scmp.eq.s32.totalorder %s22, 0
      %p82 = por %p80, %p81
      %p83 = scmp.ne.s32.totalorder %s72, %s75
      %p84 = scmp.eq.s32.totalorder %s27, 1
      %p85 = por %p83, %p84
      %p86 = scmp.ne.s32.totalorder %s75, %s76
      %p87 = scmp.eq.s32.totalorder %s27, 0
      %p88 = por %p86, %p87
      %p89 = scmp.ne.s32.totalorder %s75, %s76
      %p90 = scmp.eq.s32.totalorder %s28, 1
      %p91 = por %p89, %p90
      %p93 = scmp.ne.s32.totalorder %s76, %s92
      %p94 = scmp.eq.s32.totalorder %s28, 0
      %p95 = por %p93, %p94
      %s96 = ssub.s32 %s29, %s41
      %p97 = scmp.eq.s32.totalorder %s96, 0
      %s99 = sadd.s32 %s98, 1
      %s100 = scalar_select %p97, %s98, %s99
      %p103 = pneg %p97
      %p104 = scmp.eq.s32.totalorder %s22, 1
      %p105 = por %p103, %p104
      %p106 = scmp.ne.s32.totalorder %s98, %s101
      %p107 = scmp.eq.s32.totalorder %s22, 0
      %p108 = por %p106, %p107
      %p109 = scmp.ne.s32.totalorder %s98, %s101
      %p110 = scmp.eq.s32.totalorder %s27, 1
      %p111 = por %p109, %p110
      %p112 = scmp.ne.s32.totalorder %s101, %s102
      %p113 = scmp.eq.s32.totalorder %s27, 0
      %p114 = por %p112, %p113
      %p115 = scmp.ne.s32.totalorder %s101, %s102
      %p116 = scmp.eq.s32.totalorder %s28, 1
      %p117 = por %p115, %p116
      %p119 = scmp.ne.s32.totalorder %s102, %s118
      %p120 = scmp.eq.s32.totalorder %s28, 0
      %p121 = por %p119, %p120
      %s122 = ssub.s32 %s29, %s41
      %p123 = scmp.eq.s32.totalorder %s122, 0
      %s125 = sadd.s32 %s124, 1
      %s126 = scalar_select %p123, %s124, %s125
      %p129 = pneg %p123
      %p130 = scmp.eq.s32.totalorder %s22, 1
      %p131 = por %p129, %p130
      %p132 = scmp.ne.s32.totalorder %s124, %s127
      %p133 = scmp.eq.s32.totalorder %s22, 0
      %p134 = por %p132, %p133
      %p135 = scmp.ne.s32.totalorder %s124, %s127
      %p136 = scmp.eq.s32.totalorder %s27, 1
      %p137 = por %p135, %p136
      %p138 = scmp.ne.s32.totalorder %s127, %s128
      %p139 = scmp.eq.s32.totalorder %s27, 0
      %p140 = por %p138, %p139
      %p141 = scmp.ne.s32.totalorder %s127, %s128
      %p142 = scmp.eq.s32.totalorder %s28, 1
      %p143 = por %p141, %p142
      %p145 = scmp.ne.s32.totalorder %s128, %s144
      %p146 = scmp.eq.s32.totalorder %s28, 0
      %p147 = por %p145, %p146
      %s149 = sadd.s32 %s148, 1
      %p152 = scmp.eq.s32.totalorder %s22, 1
      %p153 = scmp.ne.s32.totalorder %s148, %s150
      %p154 = scmp.eq.s32.totalorder %s22, 0
      %p155 = por %p153, %p154
      %p156 = scmp.ne.s32.totalorder %s148, %s150
      %p157 = scmp.eq.s32.totalorder %s27, 1
      %p158 = por %p156, %p157
      %p159 = scmp.ne.s32.totalorder %s150, %s151
      %p160 = scmp.eq.s32.totalorder %s27, 0
      %p161 = por %p159, %p160
      %p162 = scmp.ne.s32.totalorder %s150, %s151
      %p163 = scmp.eq.s32.totalorder %s28, 1
      %p164 = por %p162, %p163
      %p166 = scmp.ne.s32.totalorder %s151, %s165
      %p167 = scmp.eq.s32.totalorder %s28, 0
      %p168 = por %p166, %p167
      %s170 = sadd.s32 %s169, 1
      %p173 = scmp.eq.s32.totalorder %s22, 1
      %p174 = scmp.ne.s32.totalorder %s169, %s171
      %p175 = scmp.eq.s32.totalorder %s22, 0
      %p176 = por %p174, %p175
      %p177 = scmp.ne.s32.totalorder %s169, %s171
      %p178 = scmp.eq.s32.totalorder %s27, 1
      %p179 = por %p177, %p178
      %p180 = scmp.ne.s32.totalorder %s171, %s172
      %p181 = scmp.eq.s32.totalorder %s27, 0
      %p182 = por %p180, %p181
      %p183 = scmp.ne.s32.totalorder %s171, %s172
      %p184 = scmp.eq.s32.totalorder %s28, 1
      %p185 = por %p183, %p184
      %p187 = scmp.ne.s32.totalorder %s172, %s186
      %p188 = scmp.eq.s32.totalorder %s28, 0
      %p189 = por %p187, %p188
      %s190 = ssub.s32 %s29, %s41
      %s191 = ssub.s32 %s30, %s37
      %s192 = sor.u32 %s190, %s191
      %p193 = scmp.eq.s32.totalorder %s192, 0
      %s195 = sadd.s32 %s194, 1
      %s196 = scalar_select %p193, %s194, %s195
      %p199 = pneg %p193
      %p200 = scmp.eq.s32.totalorder %s22, 1
      %p201 = por %p199, %p200
      %p202 = scmp.ne.s32.totalorder %s194, %s197
      %p203 = scmp.eq.s32.totalorder %s22, 0
      %p204 = por %p202, %p203
      %p205 = scmp.ne.s32.totalorder %s194, %s197
      %p206 = scmp.eq.s32.totalorder %s27, 1
      %p207 = por %p205, %p206
      %p208 = scmp.ne.s32.totalorder %s197, %s198
      %p209 = scmp.eq.s32.totalorder %s27, 0
      %p210 = por %p208, %p209
      %p211 = scmp.ne.s32.totalorder %s197, %s198
      %p212 = scmp.eq.s32.totalorder %s28, 1
      %p213 = por %p211, %p212
      %p215 = scmp.ne.s32.totalorder %s198, %s214
      %p216 = scmp.eq.s32.totalorder %s28, 0
      %p217 = por %p215, %p216
      %p218 = scmp.le.s32.totalorder 1, %s22
      %p219 = scmp.lt.s32.totalorder %s22, 3
      %p220 = pnand %p218, %p219
      %p221 = pneg %p220
      // Predicated region
      $region9: #{tpu_custom_call.1} parent=5 // pred_check
        _
      $region10: #{tpu_custom_call.1} parent=5 // pred_check_branch
        %223 = sbr.rel (%p220) target = $region12
      $region11: #{tpu_custom_call.1} parent=5 // pred_region
        %s224 = ssub.s32 %s22, 1
        // Predicated region
        $region13: #{tpu_custom_call.1} parent=11 // pred_check
          %p225 = pneg %p161
        $region14: #{tpu_custom_call.1} parent=11 // pred_check_branch
          %227 = sbr.rel (%p225) target = $region16
        $region15: #{tpu_custom_call.1} parent=11 // pred_region
          %229 = vsyncadd [#allocation9], 0
          %s230 = sshll.u32 %s4, 4
          %s231 = int_to_ptr.hbm [resolvable:$true] %s230
          %s232 = sshll.u32 [#allocation8], 4
          %s233 = int_to_ptr.vmem [resolvable:$true] %s232
          %238 = dma.hbm_to_vmem [thread:$0]  %s231, 2048, %s233, [#allocation9], 128, 128, 8
        $region16: #{tpu_custom_call.1} parent=11 // pred_fallthru
          _
        // Predicated region
        $region17: #{tpu_custom_call.1} parent=11 // pred_check
          %p239 = pneg %p182
        $region18: #{tpu_custom_call.1} parent=11 // pred_check_branch
          %241 = sbr.rel (%p239) target = $region20
        $region19: #{tpu_custom_call.1} parent=11 // pred_region
          _
        $region20: #{tpu_custom_call.1} parent=11 // pred_fallthru
          _
      $region12: #{tpu_custom_call.1} parent=5 // pred_fallthru
        _
      %p242 = scmp.lt.s32.totalorder %s22, 2
      // Predicated region
      $region21: #{tpu_custom_call.1} parent=5 // pred_check
        %p243 = pneg %p242
      $region22: #{tpu_custom_call.1} parent=5 // pred_check_branch
        %245 = sbr.rel (%p243) target = $region24
      $region23: #{tpu_custom_call.1} parent=5 // pred_region
        // Predicated region
        $region25: #{tpu_custom_call.1} parent=23 // pred_check
          %p246 = pneg %p56
        $region26: #{tpu_custom_call.1} parent=23 // pred_check_branch
          %248 = sbr.rel (%p246) target = $region28
        $region27: #{tpu_custom_call.1} parent=23 // pred_region
          %s249 = sand.u32 %s46, 1
          %s250 = scalar_lea.sflag [#allocation3], %s249
          %s251 = sand.u32 %s46, 1
          %s252 = smul.addr %s251, 8
          %s253 = scalar_lea.vmem [#allocation2], %s252
          %255 = vsyncadd %s250, 0
          %s256 = sadd.s32 %s30, %s29
          %s257 = smul.addr %s256, 8
          %s258 = scalar_lea.hbm %s0, %s257
          %s260 = sshll.u32 %s258, 4
          %s261 = int_to_ptr.hbm [resolvable:$true] %s260
          %s262 = sshll.u32 %s253, 4
          %s263 = int_to_ptr.vmem [resolvable:$true] %s262
          %265 = dma.hbm_to_vmem [thread:$0]  %s261, 128, %s263, %s250
        $region28: #{tpu_custom_call.1} parent=23 // pred_fallthru
          _
        // Predicated region
        $region29: #{tpu_custom_call.1} parent=23 // pred_check
          %p266 = pneg %p82
        $region30: #{tpu_custom_call.1} parent=23 // pred_check_branch
          %268 = sbr.rel (%p266) target = $region32
        $region31: #{tpu_custom_call.1} parent=23 // pred_region
          %s269 = sand.u32 %s22, 1
          %s270 = scalar_lea.sflag [#allocation6], %s269
          %s271 = sand.u32 %s72, 1
          %s272 = smul.addr %s271, 128
          %s273 = scalar_lea.vmem [#allocation5], %s272
          %275 = vsyncadd %s270, 0
          %s276 = smul.addr %s29, 16
          %s277 = smul.addr %s276, 8
          %s278 = scalar_lea.hbm %s1, %s277
          %s279 = sshll.u32 %s278, 4
          %s280 = int_to_ptr.hbm [resolvable:$true] %s279
          %s281 = sshll.u32 %s273, 4
          %s282 = int_to_ptr.vmem [resolvable:$true] %s281
          %287 = dma.hbm_to_vmem [thread:$0]  %s280, 2048, %s282, %s270, 128, 128, 8
        $region32: #{tpu_custom_call.1} parent=23 // pred_fallthru
          _
        // Predicated region
        $region33: #{tpu_custom_call.1} parent=23 // pred_check
          %p288 = pneg %p108
        $region34: #{tpu_custom_call.1} parent=23 // pred_check_branch
          %290 = sbr.rel (%p288) target = $region36
        $region35: #{tpu_custom_call.1} parent=23 // pred_region
          %s291 = sand.u32 %s22, 1
          %s292 = scalar_lea.sflag [#allocation6], %s291
          %s293 = sand.u32 %s98, 1
          %s294 = smul.addr %s293, 128
          %s295 = scalar_lea.vmem [#allocation7], %s294
          %297 = vsyncadd %s292, 0
          %s298 = smul.addr %s29, 16
          %s299 = smul.addr %s298, 8
          %s300 = scalar_lea.hbm %s2, %s299
          %s301 = sshll.u32 %s300, 4
          %s302 = int_to_ptr.hbm [resolvable:$true] %s301
          %s303 = sshll.u32 %s295, 4
          %s304 = int_to_ptr.vmem [resolvable:$true] %s303
          %309 = dma.hbm_to_vmem [thread:$0]  %s302, 2048, %s304, %s292, 128, 128, 8
        $region36: #{tpu_custom_call.1} parent=23 // pred_fallthru
          _
        // Predicated region
        $region37: #{tpu_custom_call.1} parent=23 // pred_check
          %p310 = pneg %p134
        $region38: #{tpu_custom_call.1} parent=23 // pred_check_branch
          %312 = sbr.rel (%p310) target = $region40
        $region39: #{tpu_custom_call.1} parent=23 // pred_region
          %p313 = scmp.lt.s32.totalorder %s29, 1
          %s314 = scalar_select %p313, %s29, 1
          %s315 = scalar_lea.vmem %s3, %s314
        $region40: #{tpu_custom_call.1} parent=23 // pred_fallthru
          _
      $region24: #{tpu_custom_call.1} parent=5 // pred_fallthru
        _
      %p316 = scmp.le.s32.totalorder 1, %s22
      %p317 = scmp.lt.s32.totalorder %s22, 3
      %p318 = pnand %p316, %p317
      %p319 = pneg %p318
      // Predicated region
      $region41: #{tpu_custom_call.1} parent=5 // pred_check
        _
      $region42: #{tpu_custom_call.1} parent=5 // pred_check_branch
        %321 = sbr.rel (%p318) target = $region44
      $region43: #{tpu_custom_call.1} parent=5 // pred_region
        %s322 = ssub.s32 %s22, 1
        %s323 = sand.u32 %s49, 1
        %s324 = scalar_lea.sflag [#allocation3], %s323
        %s325 = sand.u32 %s49, 1
        %s326 = smul.addr %s325, 8
        %s327 = scalar_lea.vmem [#allocation2], %s326
        // Predicated region
        $region45: #{tpu_custom_call.1} parent=43 // pred_check
          %p328 = pneg %p62
        $region46: #{tpu_custom_call.1} parent=43 // pred_check_branch
          %330 = sbr.rel (%p328) target = $region48
        $region47: #{tpu_custom_call.1} parent=43 // pred_region
          %332 = dma.done %s324, 128
        $region48: #{tpu_custom_call.1} parent=43 // pred_fallthru
          _
        %s333 = sand.u32 %s27, 1
        %s334 = scalar_lea.sflag [#allocation6], %s333
        %s335 = sand.u32 %s75, 1
        %s336 = smul.addr %s335, 128
        %s337 = scalar_lea.vmem [#allocation5], %s336
        // Predicated region
        $region49: #{tpu_custom_call.1} parent=43 // pred_check
          %p338 = pneg %p88
        $region50: #{tpu_custom_call.1} parent=43 // pred_check_branch
          %340 = sbr.rel (%p338) target = $region52
        $region51: #{tpu_custom_call.1} parent=43 // pred_region
          %342 = dma.done %s334, 2048
        $region52: #{tpu_custom_call.1} parent=43 // pred_fallthru
          _
        %s343 = sand.u32 %s27, 1
        %s344 = scalar_lea.sflag [#allocation6], %s343
        %s345 = sand.u32 %s101, 1
        %s346 = smul.addr %s345, 128
        %s347 = scalar_lea.vmem [#allocation7], %s346
        // Predicated region
        $region53: #{tpu_custom_call.1} parent=43 // pred_check
          %p348 = pneg %p114
        $region54: #{tpu_custom_call.1} parent=43 // pred_check_branch
          %350 = sbr.rel (%p348) target = $region56
        $region55: #{tpu_custom_call.1} parent=43 // pred_region
          %352 = dma.done %s344, 2048
        $region56: #{tpu_custom_call.1} parent=43 // pred_fallthru
          _
        // Predicated region
        $region57: #{tpu_custom_call.1} parent=43 // pred_check
          %p353 = pneg %p161
        $region58: #{tpu_custom_call.1} parent=43 // pred_check_branch
          %355 = sbr.rel (%p353) target = $region60
        $region59: #{tpu_custom_call.1} parent=43 // pred_region
          %357 = dma.done [#allocation9], 2048
        $region60: #{tpu_custom_call.1} parent=43 // pred_fallthru
          _
        %s358 = sand.u32 %s49, 1
        %s359 = scalar_lea.sflag [#allocation3], %s358
        %s360 = sand.u32 %s49, 1
        %s361 = smul.addr %s360, 8
        %s362 = scalar_lea.vmem [#allocation2], %s361
        %p363 = pneg %p62
        %p364 = pneg %p59
        %s365 = sand.u32 %s27, 1
        %s366 = scalar_lea.sflag [#allocation6], %s365
        %s367 = sand.u32 %s75, 1
        %s368 = smul.addr %s367, 128
        %s369 = scalar_lea.vmem [#allocation5], %s368
        %p370 = pneg %p88
        %p371 = pneg %p85
        %s372 = sand.u32 %s27, 1
        %s373 = scalar_lea.sflag [#allocation6], %s372
        %s374 = sand.u32 %s101, 1
        %s375 = smul.addr %s374, 128
        %s376 = scalar_lea.vmem [#allocation7], %s375
        %p377 = pneg %p114
        %p378 = pneg %p111
        %p379 = scmp.lt.s32.totalorder %s31, 1
        %s380 = scalar_select %p379, %s31, 1
        %s381 = scalar_lea.vmem %s3, %s380
        %p382 = pneg %p140
        %p383 = pneg %p137
        %p384 = pneg %p161
        %p385 = pneg %p158
        %p386 = pneg %p182
        %p387 = pneg %p179
        %p388 = pneg %p210
        %p389 = pneg %p207
        %s390 = sand.u32 %s197, 1
        %s391 = scalar_lea.sflag [#allocation4], %s390
        %s392 = sand.u32 %s197, 1
        %s393 = smul.addr %s392, 8
        %s394 = scalar_lea.vmem [#allocation10], %s393
        %p395 = scmp.lt.s32.totalorder %s31, 1
        %s396 = scalar_select %p395, %s31, 1
        %s397 = scalar_lea.vmem %s3, %s396
        %v398 = vld [vmem:[%s337] sm:$0xff]
        %v399 = vld [vmem:[%s337 + $0x8] sm:$0xff]
        %v400 = vld [vmem:[%s337 + $0x10] sm:$0xff]
        %v401 = vld [vmem:[%s337 + $0x18] sm:$0xff]
        %v402 = vld [vmem:[%s337 + $0x20] sm:$0xff]
        %v403 = vld [vmem:[%s337 + $0x28] sm:$0xff]
        %v404 = vld [vmem:[%s337 + $0x30] sm:$0xff]
        %v405 = vld [vmem:[%s337 + $0x38] sm:$0xff]
        %v406 = vld [vmem:[%s337 + $0x40] sm:$0xff]
        %v407 = vld [vmem:[%s337 + $0x48] sm:$0xff]
        %v408 = vld [vmem:[%s337 + $0x50] sm:$0xff]
        %v409 = vld [vmem:[%s337 + $0x58] sm:$0xff]
        %v410 = vld [vmem:[%s337 + $0x60] sm:$0xff]
        %v411 = vld [vmem:[%s337 + $0x68] sm:$0xff]
        %v412 = vld [vmem:[%s337 + $0x70] sm:$0xff]
        %v413 = vld [vmem:[%s337 + $0x78] sm:$0xff]
        %v414 = vld [vmem:[%s347] sm:$0xff]
        %v415 = vld [vmem:[%s347 + $0x8] sm:$0xff]
        %v416 = vld [vmem:[%s347 + $0x10] sm:$0xff]
        %v417 = vld [vmem:[%s347 + $0x18] sm:$0xff]
        %v418 = vld [vmem:[%s347 + $0x20] sm:$0xff]
        %v419 = vld [vmem:[%s347 + $0x28] sm:$0xff]
        %v420 = vld [vmem:[%s347 + $0x30] sm:$0xff]
        %v421 = vld [vmem:[%s347 + $0x38] sm:$0xff]
        %v422 = vld [vmem:[%s347 + $0x40] sm:$0xff]
        %v423 = vld [vmem:[%s347 + $0x48] sm:$0xff]
        %v424 = vld [vmem:[%s347 + $0x50] sm:$0xff]
        %v425 = vld [vmem:[%s347 + $0x58] sm:$0xff]
        %v426 = vld [vmem:[%s347 + $0x60] sm:$0xff]
        %v427 = vld [vmem:[%s347 + $0x68] sm:$0xff]
        %v428 = vld [vmem:[%s347 + $0x70] sm:$0xff]
        %v429 = vld [vmem:[%s347 + $0x78] sm:$0xff]
        %v430 = vld [vmem:[%s397] sm:$0x1]
        %v431 = vld [vmem:[#allocation8] sm:$0xff]
        %v432 = vld [vmem:[#allocation8 + $0x8] sm:$0xff]
        %v433 = vld [vmem:[#allocation8 + $0x10] sm:$0xff]
        %v434 = vld [vmem:[#allocation8 + $0x18] sm:$0xff]
        %v435 = vld [vmem:[#allocation8 + $0x20] sm:$0xff]
        %v436 = vld [vmem:[#allocation8 + $0x28] sm:$0xff]
        %v437 = vld [vmem:[#allocation8 + $0x30] sm:$0xff]
        %v438 = vld [vmem:[#allocation8 + $0x38] sm:$0xff]
        %v439 = vld [vmem:[#allocation8 + $0x40] sm:$0xff]
        %v440 = vld [vmem:[#allocation8 + $0x48] sm:$0xff]
        %v441 = vld [vmem:[#allocation8 + $0x50] sm:$0xff]
        %v442 = vld [vmem:[#allocation8 + $0x58] sm:$0xff]
        %v443 = vld [vmem:[#allocation8 + $0x60] sm:$0xff]
        %v444 = vld [vmem:[#allocation8 + $0x68] sm:$0xff]
        %v445 = vld [vmem:[#allocation8 + $0x70] sm:$0xff]
        %v446 = vld [vmem:[#allocation8 + $0x78] sm:$0xff]
        %v447 = vld [vmem:[%s5] sm:$0x1]
        %v448 = vld [vmem:[%s327] sm:$0xff]
        %449 = vmatpush.msra.mxu0 %v413
        %450 = vmatpush.msra.mxu0 %v412
        %451 = vmatpush.msra.mxu0 %v411
        %452 = vmatpush.msra.mxu0 %v410
        %453 = vmatpush.msra.mxu0 %v409
        %454 = vmatpush.msra.mxu0 %v408
        %455 = vmatpush.msra.mxu0 %v407
        %456 = vmatpush.msra.mxu0 %v406
        %457 = vmatpush.msra.mxu0 %v405
        %458 = vmatpush.msra.mxu0 %v404
        %459 = vmatpush.msra.mxu0 %v403
        %460 = vmatpush.msra.mxu0 %v402
        %461 = vmatpush.msra.mxu0 %v401
        %462 = vmatpush.msra.mxu0 %v400
        %463 = vmatpush.msra.mxu0 %v399
        %464 = vmatpush.msra.mxu0 %v398
        %465 = vmatmul.f32.gmra.mxu0 %v448
        %v466 = vpop.f32.mrf.mxu0
        %v467 = vadd.f32 0.0, %v466
        %468 = vdwg.mxu0
        %v470 = vperm.slane %v430, 0
        %v472 = vmul.f32 %v467, %v470
        %473 = vmax.xlane.f32.xlu0 %v472
        %v474 = vpop.xlane.xlu0 %473
        %v475 = vsub.f32 %v472, %v474
        %v476 = vmul.f32 %v475, 1.442695
        %v477 = vpow.pop %v476
        %v478 = vmul.f32 %v477, %v470
        %479 = vadd.xlane.f32.xlu0 %v478
        %v480 = vpop.xlane.xlu0 %479
        %v481 = vadd.f32 %v480, 1e-13
        %v482 = vrcp.pop %v481
        %v483 = vmul.f32 %v478, %v482
        %484 = vmatpush.msra.mxu0 %v429
        %485 = vmatpush.msra.mxu0 %v428
        %486 = vmatpush.msra.mxu0 %v427
        %487 = vmatpush.msra.mxu0 %v426
        %488 = vmatpush.msra.mxu0 %v425
        %489 = vmatpush.msra.mxu0 %v424
        %490 = vmatpush.msra.mxu0 %v423
        %491 = vmatpush.msra.mxu0 %v422
        %492 = vmatpush.msra.mxu0 %v421
        %493 = vmatpush.msra.mxu0 %v420
        %494 = vmatpush.msra.mxu0 %v419
        %495 = vmatpush.msra.mxu0 %v418
        %496 = vmatpush.msra.mxu0 %v417
        %497 = vmatpush.msra.mxu0 %v416
        %498 = vmatpush.msra.mxu0 %v415
        %499 = vmatpush.msra.mxu0 %v414
        %500 = vmatmul.f32.gmra.mxu0 %v483
        %v501 = vpop.f32.mrf.mxu0
        %v502 = vadd.f32 0.0, %v501
        %503 = vdwg.mxu0
        %v505 = vperm.slane %v447, 0
        %507 = vmatpush.msra.mxu0 %v446
        %508 = vmatpush.msra.mxu0 %v445
        %509 = vmatpush.msra.mxu0 %v444
        %510 = vmatpush.msra.mxu0 %v443
        %511 = vmatpush.msra.mxu0 %v442
        %512 = vmatpush.msra.mxu0 %v441
        %513 = vmatpush.msra.mxu0 %v440
        %514 = vmatpush.msra.mxu0 %v439
        %515 = vmatpush.msra.mxu0 %v438
        %516 = vmatpush.msra.mxu0 %v437
        %517 = vmatpush.msra.mxu0 %v436
        %518 = vmatpush.msra.mxu0 %v435
        %519 = vmatpush.msra.mxu0 %v434
        %520 = vmatpush.msra.mxu0 %v433
        %521 = vmatpush.msra.mxu0 %v432
        %522 = vmatpush.msra.mxu0 %v431
        %523 = vmatmul.f32.gmra.mxu0 %v502
        %v524 = vpop.f32.mrf.mxu0
        %v525 = vadd.f32 %v505, %v524
        %526 = vdwg.mxu0
        %v527 = vmax.f32 %v525, 0.0
        %528 = vst [vmem:[%s394] sm:$0xff] %v527
        %s529 = sand.u32 %s197, 1
        %s530 = scalar_lea.sflag [#allocation4], %s529
        %s531 = sand.u32 %s197, 1
        %s532 = smul.addr %s531, 8
        %s533 = scalar_lea.vmem [#allocation10], %s532
        // Predicated region
        $region61: #{tpu_custom_call.1} parent=43 // pred_check
          %p534 = pneg %p207
        $region62: #{tpu_custom_call.1} parent=43 // pred_check_branch
          %536 = sbr.rel (%p534) target = $region64
        $region63: #{tpu_custom_call.1} parent=43 // pred_region
          %538 = vsyncadd %s530, 0
          %s539 = sadd.s32 %s32, %s31
          %s540 = smul.addr %s539, 8
          %s541 = scalar_lea.hbm %s6, %s540
          %s543 = sshll.u32 %s533, 4
          %s544 = int_to_ptr.vmem [resolvable:$true] %s543
          %s545 = sshll.u32 %s541, 4
          %s546 = int_to_ptr.hbm [resolvable:$true] %s545
          %548 = dma.vmem_to_hbm [thread:$0]  %s544, 128, %s546, %s530
        $region64: #{tpu_custom_call.1} parent=43 // pred_fallthru
          _
      $region44: #{tpu_custom_call.1} parent=5 // pred_fallthru
        _
      %p549 = scmp.le.s32.totalorder 2, %s22
      // Predicated region
      $region65: #{tpu_custom_call.1} parent=5 // pred_check
        %p550 = pneg %p549
      $region66: #{tpu_custom_call.1} parent=5 // pred_check_branch
        %552 = sbr.rel (%p550) target = $region68
      $region67: #{tpu_custom_call.1} parent=5 // pred_region
        %s553 = ssub.s32 %s22, 2
        // Predicated region
        $region69: #{tpu_custom_call.1} parent=67 // pred_check
          %p554 = pneg %p213
        $region70: #{tpu_custom_call.1} parent=67 // pred_check_branch
          %556 = sbr.rel (%p554) target = $region72
        $region71: #{tpu_custom_call.1} parent=67 // pred_region
          %s557 = sand.u32 %s198, 1
          %s558 = scalar_lea.sflag [#allocation4], %s557
          %s559 = sand.u32 %s198, 1
          %s560 = smul.addr %s559, 8
          %s561 = scalar_lea.vmem [#allocation10], %s560
          %563 = dma.done %s558, 128
        $region72: #{tpu_custom_call.1} parent=67 // pred_fallthru
          _
      $region68: #{tpu_custom_call.1} parent=5 // pred_fallthru
        _
    $region6: #{tpu_custom_call.1} parent=1 // loop_footer
      %s26 = sadd.s32 1, %s22
    $region7: #{tpu_custom_call.1} parent=1 // loop_footer_branch
      %21 = sbr.rel target = $region3
    $region8: #{tpu_custom_call.1} parent=1 // loop_exit
      _
    %564 = vsyncpa [#allocation3], 1
    %s565 = scalar_lea.sflag [#allocation3], 1
    %566 = vsyncpa %s565, 1
    %567 = vsyncpa [#allocation6], 1
    %s568 = scalar_lea.sflag [#allocation6], 1
    %569 = vsyncpa %s568, 1
    %570 = vsyncpa [#allocation9], 1
    %571 = vsyncpa [#allocation4], 1
    %s572 = scalar_lea.sflag [#allocation4], 1
    %573 = vsyncpa %s572, 1

</llo_original>
